<compile_context>
chip_gen: v7x
topology: tpu7x:2x2x1
jax: 0.10.0
libtpu: 0.0.40
codegen_flags: <defaults>
</compile_context>

<pallas_src>
import jax
import jax.numpy as jnp
from jax import lax
from jax.experimental import pallas as pl
from jax.experimental.pallas import tpu as pltpu


def _round_up(x, m):
    return ((x + m - 1) // m) * m


def _choose_tile_b(batch, requested):
    """Pick the batch (lane) tile.

    Always a multiple of 128 so the (tile_b, d_in) input block and the (d_out, tile_b)
    output block satisfy the (8, 128) BlockSpec rule even for a ragged batch: the
    out-of-bounds tail rows are read as garbage into dead lanes (batch never mixes
    across lanes) and the matching output columns are dropped on store.
    """
    b_cover = _round_up(batch, 128)                    # smallest legal single-tile cover
    t = min(_round_up(max(int(requested), 128), 128), b_cover)
    # Prefer >= 2 grid steps when the batch allows it (v7x has 2 TensorCores).
    if pl.cdiv(batch, t) < 2 and batch >= 512:
        t = _round_up(pl.cdiv(batch, 2), 128)
    if t >= 512:
        t = _round_up(t, 256)                          # 256-wide MXU on v6e/v7x
    return t


def _make_mlp_kernel(num_layers, final_is_reduce, mxu_dtype):
    """Fused MLP kernel: tanh(W @ h + b) per hidden layer, linear final layer.

    Refs (in order): x_ref (tile_b, d_in) -- batch-major, exactly as stored in HBM --
    then [w_ref, b_ref] per layer, then o_ref (d_out, tile_b).

    In-kernel layout is feature-major ("batch on lanes"): activations are
    (width, tile_b) so the bias adds, tanh and stores are lane-dense.  MXU layers take
    bf16 operands with f32 accumulation; biases / tanh / width-1 head stay in f32.
    """

    def kernel(x_ref, *refs):
        *param_refs, o_ref = refs
        x = x_ref[...]                                            # (tile_b, d_in)

        if num_layers == 1 and final_is_reduce:
            # Degenerate net: a single width-1 Linear.  Pure VPU/XLU, all f32.
            w = param_refs[0][...]                                # (d_in, 1)
            b = param_refs[1][...]                                # (1, 1)
            h = jnp.transpose(x.astype(jnp.float32))              # (d_in, tile_b)
            o_ref[...] = (jnp.sum(h * w, axis=0, keepdims=True) + b).astype(o_ref.dtype)
            return

        # Layer 0 straight off the batch-major tile: contract d_in (dim 1 of both
        # operands) on the MXU -> (H0, tile_b), i.e. the batch lands on the lane axis.
        w0 = param_refs[0][...]                                   # (H0, d_in) bf16
        b0 = param_refs[1][...]                                   # (H0, 1)    f32
        y = lax.dot_general(
            w0, x.astype(mxu_dtype),
            dimension_numbers=(((1,), (1,)), ((), ())),
            preferred_element_type=jnp.float32,
        ) + b0
        h = y if num_layers == 1 else jnp.tanh(y)                 # tanh on EUP, f32

        for l in range(1, num_layers):
            w_ref = param_refs[2 * l]
            b_ref = param_refs[2 * l + 1]
            is_last = l == num_layers - 1
            if is_last and final_is_reduce:
                # Width-1 head: VPU multiply + cross-sublane reduce; skips the MXU.
                y = jnp.sum(h * w_ref[...], axis=0, keepdims=True) + b_ref[...]
            else:
                y = jnp.dot(w_ref[...], h.astype(mxu_dtype),
                            preferred_element_type=jnp.float32) + b_ref[...]
            h = y if is_last else jnp.tanh(y)

        o_ref[...] = h.astype(o_ref.dtype)

    return kernel


def logistic_regressor_forward(x, params, *, tile_b=4096, mxu_dtype=jnp.bfloat16):
    """Forward pass of LogisticRegressor.

    x:      (B, d_in) batch-major (torch layout); streamed into the kernel as-is.
    params: list of (w, b) per nn.Linear in torch layout: w (out, in), b (out,).
    Returns (B, d_out) raw logits (the module applies no sigmoid).
    """
    B, d_in = x.shape
    d_out = params[-1][0].shape[0]
    num_layers = len(params)
    final_is_reduce = d_out == 1

    tile_b = _choose_tile_b(B, tile_b)
    n_tiles = pl.cdiv(B, tile_b)

    # ---- pack params into kernel layout ----
    kernel_params = []
    for l, (w, b) in enumerate(params):
        out_f, in_f = w.shape
        if l == num_layers - 1 and final_is_reduce:
            # width-1 head computed as multiply+reduce: weight stored as an f32 column
            kernel_params.append(w.reshape(in_f, 1).astype(jnp.float32))
            kernel_params.append(b.reshape(1, 1).astype(jnp.float32))
        else:
            kernel_params.append(w.astype(mxu_dtype))             # pre-cast for the MXU
            kernel_params.append(b.reshape(out_f, 1).astype(jnp.float32))

    # ---- BlockSpecs ----
    # x streams in batch-major tiles; params use constant index_maps so they are DMA'd
    # once and stay VMEM-resident across grid steps.
    x_spec = pl.BlockSpec((tile_b, d_in), lambda i: (i, 0))
    param_specs = [pl.BlockSpec(p.shape, lambda i: (0, 0)) for p in kernel_params]
    out_spec = pl.BlockSpec((d_out, tile_b), lambda i: (0, i))

    # ---- explicit VMEM budget: <= 48 MiB so v7x (64 MiB physical) is always safe ----
    widths = [d_in] + [w.shape[0] for (w, _) in params]
    param_bytes = sum(int(p.size) * p.dtype.itemsize for p in kernel_params)
    stream_bytes = 2 * tile_b * (d_in * x.dtype.itemsize + d_out * 4)  # double-buffered x / out
    act_bytes = 6 * max(widths) * tile_b * 4                           # live activations / casts
    vmem_limit = int(min(max(2 * (param_bytes + stream_bytes + act_bytes), 32 << 20), 48 << 20))

    out = pl.pallas_call(
        _make_mlp_kernel(num_layers, final_is_reduce, mxu_dtype),
        out_shape=jax.ShapeDtypeStruct((d_out, B), jnp.float32),
        grid=(n_tiles,),
        in_specs=[x_spec] + param_specs,
        out_specs=out_spec,
        compiler_params=pltpu.CompilerParams(
            dimension_semantics=("parallel",),  # batch tiles shard across TensorCores
            vmem_limit_bytes=vmem_limit,
        ),
    )(x, *kernel_params)

    # (d_out, B) -> (B, d_out): trivial plumbing on the tiny output (d_out * B elements).
    return out.T


def init_params(key, input_size, hidden_size, output_size):
    """Deterministic init mimicking torch nn.Linear: w (out, in), b (out,),
    both ~ U(-1/sqrt(fan_in), +1/sqrt(fan_in))."""
    sizes = [input_size] + list(hidden_size) + [output_size]
    params = []
    for i in range(len(sizes) - 1):
        fan_in, fan_out = sizes[i], sizes[i + 1]
        key, kw, kb = jax.random.split(key, 3)
        bound = 1.0 / float(fan_in) ** 0.5
        w = jax.random.uniform(kw, (fan_out, fan_in), jnp.float32, -bound, bound)
        b = jax.random.uniform(kb, (fan_out,), jnp.float32, -bound, bound)
        params.append((w, b))
    return params


def reference_forward(x, params, mxu_dtype=None):
    """Pure-JAX reference matching the torch module (Linear -> Tanh ... -> Linear).
    If mxu_dtype is given, matmul operands are cast exactly as the kernel casts them
    (f32 accumulate), except the final width-1 layer which the kernel keeps in f32."""
    h = x
    n = len(params)
    for i, (w, b) in enumerate(params):
        is_last = i == n - 1
        if mxu_dtype is not None and not (is_last and w.shape[0] == 1):
            h = jnp.dot(h.astype(mxu_dtype), w.T.astype(mxu_dtype),
                        preferred_element_type=jnp.float32) + b
        else:
            h = h @ w.T + b
        if not is_last:
            h = jnp.tanh(h)
    return h


if __name__ == "__main__":
    # LogisticRegressor(input_size=16, output_size=1, hidden_size=[32])
    # -> Linear(16, 32) -> Tanh -> Linear(32, 1)   (raw logits, no sigmoid)
    batch, input_size, output_size = 300, 16, 1   # non-multiple-of-128 batch: ragged tail
    hidden_size = [32]

    key = jax.random.PRNGKey(0)
    key, kx = jax.random.split(key)
    x = jax.random.normal(kx, (batch, input_size), jnp.float32)
    params = init_params(key, input_size, hidden_size, output_size)

    # Small explicit tile -> 3 grid steps: exercises pipelining, VMEM-resident weights
    # and the out-of-bounds batch tail.  Production callers keep the default tile_b=4096.
    y = jax.block_until_ready(logistic_regressor_forward(x, params, tile_b=128))
    y_def = jax.block_until_ready(logistic_regressor_forward(x, params))  # default tile path

    y_ref_f32 = reference_forward(x, params)                          # exact f32 reference
    y_ref_mxu = reference_forward(x, params, mxu_dtype=jnp.bfloat16)   # matches kernel MXU casts

    assert y.shape == (batch, output_size)
    assert jnp.allclose(y, y_ref_mxu, atol=2e-4, rtol=2e-4), float(jnp.max(jnp.abs(y - y_ref_mxu)))
    assert jnp.allclose(y, y_ref_f32, atol=5e-2, rtol=5e-2)
    assert jnp.allclose(y_def, y, atol=1e-5, rtol=1e-5)

    print("KERNEL_OK")
</pallas_src>

<mosaic_0001>
module attributes {stable_mosaic.version = 11 : i64} {
  func.func @kernel(%arg0: i32, %arg1: memref<128x16xf32, #tpu.memory_space<vmem>>, %arg2: memref<32x16xbf16, #tpu.memory_space<vmem>>, %arg3: memref<32x1xf32, #tpu.memory_space<vmem>>, %arg4: memref<32x1xf32, #tpu.memory_space<vmem>>, %arg5: memref<1x1xf32, #tpu.memory_space<vmem>>, %arg6: memref<1x128xf32, #tpu.memory_space<vmem>>) attributes {dimension_semantics = [#tpu.dimension_semantics<parallel>], iteration_bounds = array<i64: 3>, scalar_prefetch = 0 : i64, scratch_operands = 0 : i64, tpu.core_type = #tpu.core_type<tc>, window_params = [{transform_indices = @transform_0, window_bounds = array<i64: 128, 16>}, {pipeline_mode = #tpu.pipeline_mode<synchronous>, transform_indices = @transform_1, window_bounds = array<i64: 32, 16>}, {pipeline_mode = #tpu.pipeline_mode<synchronous>, transform_indices = @transform_2, window_bounds = array<i64: 32, 1>}, {pipeline_mode = #tpu.pipeline_mode<synchronous>, transform_indices = @transform_3, window_bounds = array<i64: 32, 1>}, {pipeline_mode = #tpu.pipeline_mode<synchronous>, transform_indices = @transform_4, window_bounds = array<i64: 1, 1>}, {transform_indices = @transform_5, window_bounds = array<i64: 1, 128>}]} {
    %c0 = arith.constant 0 : index
    %c0_0 = arith.constant 0 : index
    %0 = vector.load %arg1[%c0, %c0_0] : memref<128x16xf32, #tpu.memory_space<vmem>>, vector<128x16xf32>
    %c0_1 = arith.constant 0 : index
    %c0_2 = arith.constant 0 : index
    %1 = vector.load %arg2[%c0_1, %c0_2] : memref<32x16xbf16, #tpu.memory_space<vmem>>, vector<32x16xbf16>
    %c0_3 = arith.constant 0 : index
    %c0_4 = arith.constant 0 : index
    %2 = vector.load %arg3[%c0_3, %c0_4] : memref<32x1xf32, #tpu.memory_space<vmem>>, vector<32x1xf32>
    %3 = arith.truncf %0 : vector<128x16xf32> to vector<128x16xbf16>
    %cst = arith.constant dense<0.000000e+00> : vector<32x128xf32>
    %4 = tpu.matmul %1, %3, %cst {dimension_numbers = #tpu.dot_dimension_numbers<[1], [1], [0], [0], [0, 0, 1, 0], [], []>} : vector<32x16xbf16>, vector<128x16xbf16>, vector<32x128xf32> -> vector<32x128xf32>
    %5 = vector.broadcast %2 : vector<32x1xf32> to vector<32x128xf32>
    %6 = arith.addf %4, %5 : vector<32x128xf32>
    %7 = math.tanh %6 : vector<32x128xf32>
    %c0_5 = arith.constant 0 : index
    %c0_6 = arith.constant 0 : index
    %8 = vector.load %arg4[%c0_5, %c0_6] : memref<32x1xf32, #tpu.memory_space<vmem>>, vector<32x1xf32>
    %9 = vector.broadcast %8 : vector<32x1xf32> to vector<32x128xf32>
    %10 = arith.mulf %7, %9 : vector<32x128xf32>
    %cst_7 = arith.constant dense<0.000000e+00> : vector<128xf32>
    %11 = vector.multi_reduction <add>, %10, %cst_7 [0] : vector<32x128xf32> to vector<128xf32>
    %12 = vector.shape_cast %11 : vector<128xf32> to vector<1x128xf32>
    %c0_8 = arith.constant 0 : index
    %c0_9 = arith.constant 0 : index
    %13 = vector.load %arg5[%c0_8, %c0_9] : memref<1x1xf32, #tpu.memory_space<vmem>>, vector<1x1xf32>
    %14 = vector.broadcast %13 : vector<1x1xf32> to vector<1x128xf32>
    %15 = arith.addf %12, %14 : vector<1x128xf32>
    %c0_10 = arith.constant 0 : index
    %c0_11 = arith.constant 0 : index
    %16 = vector.load %arg6[%c0_10, %c0_11] : memref<1x128xf32, #tpu.memory_space<vmem>>, vector<1x128xf32>
    tpu.vector_store %arg6[%c0_10, %c0_11], %15 {strides = array<i32>} : memref<1x128xf32, #tpu.memory_space<vmem>>, vector<1x128xf32>,
    return
  }
  func.func @transform_0(%arg0: i32) -> (i32, i32) {
    %c0_i32 = arith.constant 0 : i32
    %c0_i32_0 = arith.constant 0 : i32
    return %arg0, %c0_i32 : i32, i32
  }
  func.func @transform_1(%arg0: i32) -> (i32, i32) {
    %c0_i32 = arith.constant 0 : i32
    %c0_i32_0 = arith.constant 0 : i32
    %c0_i32_1 = arith.constant 0 : i32
    return %c0_i32, %c0_i32_0 : i32, i32
  }
  func.func @transform_2(%arg0: i32) -> (i32, i32) {
    %c0_i32 = arith.constant 0 : i32
    %c0_i32_0 = arith.constant 0 : i32
    %c0_i32_1 = arith.constant 0 : i32
    return %c0_i32, %c0_i32_0 : i32, i32
  }
  func.func @transform_3(%arg0: i32) -> (i32, i32) {
    %c0_i32 = arith.constant 0 : i32
    %c0_i32_0 = arith.constant 0 : i32
    %c0_i32_1 = arith.constant 0 : i32
    return %c0_i32, %c0_i32_0 : i32, i32
  }
  func.func @transform_4(%arg0: i32) -> (i32, i32) {
    %c0_i32 = arith.constant 0 : i32
    %c0_i32_0 = arith.constant 0 : i32
    %c0_i32_1 = arith.constant 0 : i32
    return %c0_i32, %c0_i32_0 : i32, i32
  }
  func.func @transform_5(%arg0: i32) -> (i32, i32) {
    %c0_i32 = arith.constant 0 : i32
    %c0_i32_0 = arith.constant 0 : i32
    return %c0_i32, %arg0 : i32, i32
  }
}

</mosaic_0001>

<llo_original>
// kernel: tpu_custom_call.1
$region0: #{tpu_custom_call.1}
  #allocation0 [shape = 'u32[]', space=smem, size = 0x4, offset = 0x4, fixed_abs, tag = 'smem constant byte address 0x4 - core index']
  #allocation1 [shape = 'u32[144,128]{1,0:T(1,128)}', space=vmem, size = 0x12000, scoped, tag = 'internal scratch']
  #allocation2 [shape = 'f32[1,1]{1,0:T(1,128)S(1)}', space=vmem, size = 0x200, scoped, tag = 'scoped memory for tpu_custom_call.1']
  %s0 = inlined_call_operand.vmem [shape: f32[300,16], index: 0, kind: input, shape index: {}]
  %s1 = inlined_call_operand.vmem [shape: bf16[32,16], index: 1, kind: input, shape index: {}]
  %s2 = inlined_call_operand.vmem [shape: f32[32,1], index: 2, kind: input, shape index: {}]
  %s3 = inlined_call_operand.vmem [shape: f32[32,1], index: 3, kind: input, shape index: {}]
  %s4 = inlined_call_operand.<no memory space> [shape: f32[1,1], index: 4, kind: input, shape index: {}]
  %s5 = inlined_call_operand.hbm [shape: f32[1,300], index: 5, kind: output, shape index: {}]
  %s6 = sld [smem:[#allocation0]]
  $region53: #{tpu_custom_call.1} parent=0
    _
  %s8 = ssub.s32 1, %s6
  %s9 = scalar_select 0, %s8, %s6
  %v10 = vstv %s4
  %11 = vst [vmem:[#allocation2] sm:$0x1] %v10
  $region1: #{tpu_custom_call.1} parent=0
    #allocation3 [shape = 'u8[1024]{0}', space=vmem, size = 0x400, scoped, tag = 'output window, operand 0']
    #allocation4 [shape = 's32[2]{0}', space=sflag, size = 0x8, scoped, tag = 'scoped memory for tpu_custom_call.1']
    %12 = vsyncpa [#allocation4], 0
    %s13 = scalar_lea.sflag [#allocation4], 1
    %14 = vsyncpa %s13, 0
    loop: start=0, step=1, limit=5
    $region2: #{tpu_custom_call.1} parent=1 // loop_pre_header
      _
    $region3: #{tpu_custom_call.1} parent=1 // loop_header
      %s16 = sphi 0, %s20
      %p17 = scmp.ge.s32.totalorder %s16, 5
      %s26 = sphi 0, %s28
      %s29 = sphi 0, %s26
      %s30 = sphi 0, %s29
      %s46 = sphi 0, %s30
      %s50 = sphi 0, %s50
      %s52 = sphi 0, %s50
      %s53 = sphi 0, %s52
      %s67 = sphi 0, %s53
      %s71 = sphi 0, %s71
      %s73 = sphi 0, %s71
      %s74 = sphi 0, %s73
      %s88 = sphi 0, %s74
      %s92 = sphi 0, %s92
      %s94 = sphi 0, %s92
      %s95 = sphi 0, %s94
      %s109 = sphi 0, %s95
      %s113 = sphi 0, %s113
      %s115 = sphi 0, %s113
      %s116 = sphi 0, %s115
      %s130 = sphi 0, %s116
      %s136 = sphi 0, %s138
      %s139 = sphi 0, %s136
      %s140 = sphi 0, %s139
      %s156 = sphi 0, %s140
    $region4: #{tpu_custom_call.1} parent=1 // loop_header_branch
      %19 = sbr.rel (%p17) target = $region8
    $region5: #{tpu_custom_call.1} parent=1 // loop_body
      %s21 = ssub.s32 %s16, 1
      %s22 = ssub.s32 %s16, 2
      %s23 = sadd.s32 %s16, 1
      %s24 = ssub.s32 %s16, %s23
      %p25 = scmp.eq.s32.totalorder %s24, 0
      %s27 = sadd.s32 %s26, 1
      %s28 = scalar_select %p25, %s26, %s27
      %p31 = pneg %p25
      %p32 = scmp.eq.s32.totalorder %s16, 2
      %p33 = por %p31, %p32
      %p34 = scmp.ne.s32.totalorder %s26, %s29
      %p35 = scmp.eq.s32.totalorder %s16, 0
      %p36 = por %p34, %p35
      %p37 = scmp.ne.s32.totalorder %s26, %s29
      %p38 = scmp.eq.s32.totalorder %s21, 2
      %p39 = por %p37, %p38
      %p40 = scmp.ne.s32.totalorder %s29, %s30
      %p41 = scmp.eq.s32.totalorder %s21, 0
      %p42 = por %p40, %p41
      %p43 = scmp.ne.s32.totalorder %s29, %s30
      %p44 = scmp.eq.s32.totalorder %s22, 2
      %p45 = por %p43, %p44
      %p47 = scmp.ne.s32.totalorder %s30, %s46
      %p48 = scmp.eq.s32.totalorder %s22, 0
      %p49 = por %p47, %p48
      %s51 = sadd.s32 %s50, 1
      %p54 = scmp.eq.s32.totalorder %s16, 2
      %p55 = scmp.ne.s32.totalorder %s50, %s52
      %p56 = scmp.eq.s32.totalorder %s16, 0
      %p57 = por %p55, %p56
      %p58 = scmp.ne.s32.totalorder %s50, %s52
      %p59 = scmp.eq.s32.totalorder %s21, 2
      %p60 = por %p58, %p59
      %p61 = scmp.ne.s32.totalorder %s52, %s53
      %p62 = scmp.eq.s32.totalorder %s21, 0
      %p63 = por %p61, %p62
      %p64 = scmp.ne.s32.totalorder %s52, %s53
      %p65 = scmp.eq.s32.totalorder %s22, 2
      %p66 = por %p64, %p65
      %p68 = scmp.ne.s32.totalorder %s53, %s67
      %p69 = scmp.eq.s32.totalorder %s22, 0
      %p70 = por %p68, %p69
      %s72 = sadd.s32 %s71, 1
      %p75 = scmp.eq.s32.totalorder %s16, 2
      %p76 = scmp.ne.s32.totalorder %s71, %s73
      %p77 = scmp.eq.s32.totalorder %s16, 0
      %p78 = por %p76, %p77
      %p79 = scmp.ne.s32.totalorder %s71, %s73
      %p80 = scmp.eq.s32.totalorder %s21, 2
      %p81 = por %p79, %p80
      %p82 = scmp.ne.s32.totalorder %s73, %s74
      %p83 = scmp.eq.s32.totalorder %s21, 0
      %p84 = por %p82, %p83
      %p85 = scmp.ne.s32.totalorder %s73, %s74
      %p86 = scmp.eq.s32.totalorder %s22, 2
      %p87 = por %p85, %p86
      %p89 = scmp.ne.s32.totalorder %s74, %s88
      %p90 = scmp.eq.s32.totalorder %s22, 0
      %p91 = por %p89, %p90
      %s93 = sadd.s32 %s92, 1
      %p96 = scmp.eq.s32.totalorder %s16, 2
      %p97 = scmp.ne.s32.totalorder %s92, %s94
      %p98 = scmp.eq.s32.totalorder %s16, 0
      %p99 = por %p97, %p98
      %p100 = scmp.ne.s32.totalorder %s92, %s94
      %p101 = scmp.eq.s32.totalorder %s21, 2
      %p102 = por %p100, %p101
      %p103 = scmp.ne.s32.totalorder %s94, %s95
      %p104 = scmp.eq.s32.totalorder %s21, 0
      %p105 = por %p103, %p104
      %p106 = scmp.ne.s32.totalorder %s94, %s95
      %p107 = scmp.eq.s32.totalorder %s22, 2
      %p108 = por %p106, %p107
      %p110 = scmp.ne.s32.totalorder %s95, %s109
      %p111 = scmp.eq.s32.totalorder %s22, 0
      %p112 = por %p110, %p111
      %s114 = sadd.s32 %s113, 1
      %p117 = scmp.eq.s32.totalorder %s16, 2
      %p118 = scmp.ne.s32.totalorder %s113, %s115
      %p119 = scmp.eq.s32.totalorder %s16, 0
      %p120 = por %p118, %p119
      %p121 = scmp.ne.s32.totalorder %s113, %s115
      %p122 = scmp.eq.s32.totalorder %s21, 2
      %p123 = por %p121, %p122
      %p124 = scmp.ne.s32.totalorder %s115, %s116
      %p125 = scmp.eq.s32.totalorder %s21, 0
      %p126 = por %p124, %p125
      %p127 = scmp.ne.s32.totalorder %s115, %s116
      %p128 = scmp.eq.s32.totalorder %s22, 2
      %p129 = por %p127, %p128
      %p131 = scmp.ne.s32.totalorder %s116, %s130
      %p132 = scmp.eq.s32.totalorder %s22, 0
      %p133 = por %p131, %p132
      %s134 = ssub.s32 %s16, %s23
      %p135 = scmp.eq.s32.totalorder %s134, 0
      %s137 = sadd.s32 %s136, 1
      %s138 = scalar_select %p135, %s136, %s137
      %p141 = pneg %p135
      %p142 = scmp.eq.s32.totalorder %s16, 2
      %p143 = por %p141, %p142
      %p144 = scmp.ne.s32.totalorder %s136, %s139
      %p145 = scmp.eq.s32.totalorder %s16, 0
      %p146 = por %p144, %p145
      %p147 = scmp.ne.s32.totalorder %s136, %s139
      %p148 = scmp.eq.s32.totalorder %s21, 2
      %p149 = por %p147, %p148
      %p150 = scmp.ne.s32.totalorder %s139, %s140
      %p151 = scmp.eq.s32.totalorder %s21, 0
      %p152 = por %p150, %p151
      %p153 = scmp.ne.s32.totalorder %s139, %s140
      %p154 = scmp.eq.s32.totalorder %s22, 2
      %p155 = por %p153, %p154
      %p157 = scmp.ne.s32.totalorder %s140, %s156
      %p158 = scmp.eq.s32.totalorder %s22, 0
      %p159 = por %p157, %p158
      %p160 = scmp.le.s32.totalorder 1, %s16
      %p161 = scmp.lt.s32.totalorder %s16, 4
      %p162 = pnand %p160, %p161
      %p163 = pneg %p162
      // Predicated region
      $region9: #{tpu_custom_call.1} parent=5 // pred_check
        _
      $region10: #{tpu_custom_call.1} parent=5 // pred_check_branch
        %165 = sbr.rel (%p162) target = $region12
      $region11: #{tpu_custom_call.1} parent=5 // pred_region
        %s166 = ssub.s32 %s16, 1
        // Predicated region
        $region13: #{tpu_custom_call.1} parent=11 // pred_check
          %p167 = pneg %p63
        $region14: #{tpu_custom_call.1} parent=11 // pred_check_branch
          %169 = sbr.rel (%p167) target = $region16
        $region15: #{tpu_custom_call.1} parent=11 // pred_region
          _
        $region16: #{tpu_custom_call.1} parent=11 // pred_fallthru
          _
        // Predicated region
        $region17: #{tpu_custom_call.1} parent=11 // pred_check
          %p170 = pneg %p84
        $region18: #{tpu_custom_call.1} parent=11 // pred_check_branch
          %172 = sbr.rel (%p170) target = $region20
        $region19: #{tpu_custom_call.1} parent=11 // pred_region
          _
        $region20: #{tpu_custom_call.1} parent=11 // pred_fallthru
          _
        // Predicated region
        $region21: #{tpu_custom_call.1} parent=11 // pred_check
          %p173 = pneg %p105
        $region22: #{tpu_custom_call.1} parent=11 // pred_check_branch
          %175 = sbr.rel (%p173) target = $region24
        $region23: #{tpu_custom_call.1} parent=11 // pred_region
          _
        $region24: #{tpu_custom_call.1} parent=11 // pred_fallthru
          _
        // Predicated region
        $region25: #{tpu_custom_call.1} parent=11 // pred_check
          %p176 = pneg %p126
        $region26: #{tpu_custom_call.1} parent=11 // pred_check_branch
          %178 = sbr.rel (%p176) target = $region28
        $region27: #{tpu_custom_call.1} parent=11 // pred_region
          _
        $region28: #{tpu_custom_call.1} parent=11 // pred_fallthru
          _
      $region12: #{tpu_custom_call.1} parent=5 // pred_fallthru
        _
      %p179 = scmp.lt.s32.totalorder %s16, 3
      // Predicated region
      $region29: #{tpu_custom_call.1} parent=5 // pred_check
        %p180 = pneg %p179
      $region30: #{tpu_custom_call.1} parent=5 // pred_check_branch
        %182 = sbr.rel (%p180) target = $region32
      $region31: #{tpu_custom_call.1} parent=5 // pred_region
        // Predicated region
        $region33: #{tpu_custom_call.1} parent=31 // pred_check
          %p183 = pneg %p36
        $region34: #{tpu_custom_call.1} parent=31 // pred_check_branch
          %185 = sbr.rel (%p183) target = $region36
        $region35: #{tpu_custom_call.1} parent=31 // pred_region
          %s186 = smul.u32 16, %s16
          %s187 = ssub.s32 38, %s186
          %p188 = scmp.lt.s32.totalorder %s187, 16
          %s189 = scalar_select %p188, %s187, 16
          %s190 = smul.u32 128, %s189
          %p191 = scmp.lt.s32.totalorder %s186, 37
          %s192 = scalar_select %p191, %s186, 37
          %s193 = smul.addr %s192, 8
          %s194 = scalar_lea.vmem %s0, %s193
          %s195 = smul.u32 16, %s16
          %s196 = ssub.s32 38, %s195
          %p197 = scmp.lt.s32.totalorder %s196, 16
          %s198 = scalar_select %p197, %s196, 16
          %s199 = smul.u32 128, %s198
        $region36: #{tpu_custom_call.1} parent=31 // pred_fallthru
          _
      $region32: #{tpu_custom_call.1} parent=5 // pred_fallthru
        _
      %p200 = scmp.le.s32.totalorder 1, %s16
      %p201 = scmp.lt.s32.totalorder %s16, 4
      %p202 = pnand %p200, %p201
      %p203 = pneg %p202
      // Predicated region
      $region37: #{tpu_custom_call.1} parent=5 // pred_check
        _
      $region38: #{tpu_custom_call.1} parent=5 // pred_check_branch
        %205 = sbr.rel (%p202) target = $region40
      $region39: #{tpu_custom_call.1} parent=5 // pred_region
        %s206 = ssub.s32 %s16, 1
        %s207 = smul.u32 16, %s21
        %s208 = ssub.s32 38, %s207
        %p209 = scmp.lt.s32.totalorder %s208, 16
        %s210 = scalar_select %p209, %s208, 16
        %s211 = smul.u32 128, %s210
        %p212 = scmp.lt.s32.totalorder %s207, 37
        %s213 = scalar_select %p212, %s207, 37
        %s214 = smul.addr %s213, 8
        %s215 = scalar_lea.vmem %s0, %s214
        %p216 = pneg %p42
        %p217 = pneg %p39
        %p218 = pneg %p63
        %p219 = pneg %p60
        %p220 = pneg %p84
        %p221 = pneg %p81
        %p222 = pneg %p105
        %p223 = pneg %p102
        %p224 = pneg %p126
        %p225 = pneg %p123
        %p226 = pneg %p152
        %p227 = pneg %p149
        %s228 = sand.u32 %s139, 1
        %s229 = scalar_lea.sflag [#allocation4], %s228
        %s230 = sand.u32 %s139, 1
        %s231 = scalar_lea.vmem [#allocation3], %s230
        %s232 = smul.u32 16, %s21
        %s233 = ssub.s32 38, %s232
        %p234 = scmp.lt.s32.totalorder %s233, 16
        %s235 = scalar_select %p234, %s233, 16
        %s236 = smul.u32 128, %s235
        %p237 = scmp.lt.s32.totalorder %s232, 37
        %s238 = scalar_select %p237, %s232, 37
        %s239 = smul.addr %s238, 8
        %s240 = scalar_lea.vmem %s0, %s239
        %s241 = smul.u32 16, %s21
        %s242 = ssub.s32 38, %s241
        %p243 = scmp.lt.s32.totalorder %s242, 16
        %s244 = scalar_select %p243, %s242, 16
        %s245 = smul.u32 128, %s244
        %v247 = vld [vmem:[%s240] sm:$0xff]
        %v248 = vld [vmem:[%s240 + $0x8] sm:$0xff]
        %v249 = vld [vmem:[%s240 + $0x10] sm:$0xff]
        %v250 = vld [vmem:[%s240 + $0x18] sm:$0xff]
        %v251 = vld [vmem:[%s240 + $0x20] sm:$0xff]
        %v252 = vld [vmem:[%s240 + $0x28] sm:$0xff]
        %v253 = vld [vmem:[%s240 + $0x30] sm:$0xff]
        %v254 = vld [vmem:[%s240 + $0x38] sm:$0xff]
        %v255 = vld [vmem:[%s240 + $0x40] sm:$0xff]
        %v256 = vld [vmem:[%s240 + $0x48] sm:$0xff]
        %v257 = vld [vmem:[%s240 + $0x50] sm:$0xff]
        %v258 = vld [vmem:[%s240 + $0x58] sm:$0xff]
        %v259 = vld [vmem:[%s240 + $0x60] sm:$0xff]
        %v260 = vld [vmem:[%s240 + $0x68] sm:$0xff]
        %v261 = vld [vmem:[%s240 + $0x70] sm:$0xff]
        %v262 = vld [vmem:[%s240 + $0x78] sm:$0xff]
        %v263 = vld [vmem:[%s1] sm:$0xf]
        %v264 = vld [vmem:[%s1 + $0x4] sm:$0xf]
        %v265 = vld [vmem:[%s1 + $0x8] sm:$0xf]
        %v266 = vld [vmem:[%s1 + $0xc] sm:$0xf]
        %v267 = vld [vmem:[%s2] sm:$0xff]
        %v268 = vld [vmem:[%s2 + $0x8] sm:$0xff]
        %v269 = vld [vmem:[%s2 + $0x10] sm:$0xff]
        %v270 = vld [vmem:[%s2 + $0x18] sm:$0xff]
        %v271 = vpack.c.bf16 %v248, %v247
        %v272 = vpack.c.bf16 %v250, %v249
        %v273 = vpack.c.bf16 %v252, %v251
        %v274 = vpack.c.bf16 %v254, %v253
        %v275 = vpack.c.bf16 %v256, %v255
        %v276 = vpack.c.bf16 %v258, %v257
        %v277 = vpack.c.bf16 %v260, %v259
        %v278 = vpack.c.bf16 %v262, %v261
        %280 = vset.pattern.permute.xlu0 0
        %281 = vperm.xlu0 %280, %v267
        %v282 = vpop.permute.xlu0 %281
        %285 = vset.pattern.permute.xlu0 0
        %286 = vperm.xlu0 %285, %v268
        %v287 = vpop.permute.xlu0 %286
        %290 = vset.pattern.permute.xlu0 0
        %291 = vperm.xlu0 %290, %v269
        %v292 = vpop.permute.xlu0 %291
        %295 = vset.pattern.permute.xlu0 0
        %296 = vperm.xlu0 %295, %v270
        %v297 = vpop.permute.xlu0 %296
        %v303 = vunpack.c.l.b16 %v263
        %v304 = vunpack.c.l.b16 %v264
        %v305 = vunpack.c.l.b16 %v265
        %v306 = vunpack.c.l.b16 %v266
        %v307 = vpack.c.b16 %v304, %v303
        %v308 = vpack.c.b16 %v306, %v305
        %vm309 = vcmask 130048
        %v311 = vsel %vm309, %v307, 0
        %v314 = vsel %vm309, %v308, 0
        %v317 = vsel %vm309, %v271, 0
        %v320 = vsel %vm309, %v272, 0
        %v323 = vsel %vm309, %v273, 0
        %v326 = vsel %vm309, %v274, 0
        %v329 = vsel %vm309, %v275, 0
        %v332 = vsel %vm309, %v276, 0
        %v335 = vsel %vm309, %v277, 0
        %v338 = vsel %vm309, %v278, 0
        %340 = vmatprep.subr.bf16.mxu0 0
        %341 = vmatpush1.bf16.xpose.msra.mxu0 %v317
        %342 = vmatprep.subr.bf16.mxu0 0
        %343 = vmatpush1.bf16.xpose.msra.mxu0 %v320
        %344 = vmatprep.subr.bf16.mxu0 0
        %345 = vmatpush1.bf16.xpose.msra.mxu0 %v323
        %346 = vmatprep.subr.bf16.mxu0 0
        %347 = vmatpush1.bf16.xpose.msra.mxu0 %v326
        %348 = vmatprep.subr.bf16.mxu0 0
        %349 = vmatpush1.bf16.xpose.msra.mxu0 %v329
        %350 = vmatprep.subr.bf16.mxu0 0
        %351 = vmatpush1.bf16.xpose.msra.mxu0 %v332
        %352 = vmatprep.subr.bf16.mxu0 0
        %353 = vmatpush1.bf16.xpose.msra.mxu0 %v335
        %354 = vmatprep.subr.bf16.mxu0 0
        %355 = vmatpush1.bf16.xpose.msra.mxu0 %v338
        %356 = vmatprep.subr.bf16.mxu0 0
        %357 = vmatpush1.bf16.xpose.msra.mxu0 0
        %358 = vmatprep.subr.bf16.mxu0 0
        %359 = vmatpush1.bf16.xpose.msra.mxu0 0
        %360 = vmatprep.subr.bf16.mxu0 0
        %361 = vmatpush1.bf16.xpose.msra.mxu0 0
        %362 = vmatprep.subr.bf16.mxu0 0
        %363 = vmatpush1.bf16.xpose.msra.mxu0 0
        %364 = vmatprep.subr.bf16.mxu0 0
        %365 = vmatpush1.bf16.xpose.msra.mxu0 0
        %366 = vmatprep.subr.bf16.mxu0 0
        %367 = vmatpush1.bf16.xpose.msra.mxu0 0
        %368 = vmatprep.subr.bf16.mxu0 0
        %369 = vmatpush1.bf16.xpose.msra.mxu0 0
        %370 = vmatprep.subr.bf16.mxu0 0
        %371 = vmatpush1.bf16.xpose.msra.mxu0 0
        %372 = vmatprep.mubr.bf16.mxu0 0
        %373 = vmatmul.mubr.bf16.gmra.mrb[0].mxu0 %v311
        %v374 = vpop.f32.mrb[0].mxu0
        %v375 = vadd.f32 %v282, %v374
        %v376 = vpop.f32.mrb[0].mxu0
        %v377 = vpop.f32.mrb[0].mxu0
        %v378 = vadd.f32 %v287, %v377
        %v379 = vpop.f32.mrb[0].mxu0
        %380 = vmatprep.mubr.bf16.mxu0 0
        %381 = vmatmul.mubr.bf16.gmra.mrb[0].mxu0 %v314
        %v382 = vpop.f32.mrb[0].mxu0
        %v383 = vadd.f32 %v292, %v382
        %v384 = vpop.f32.mrb[0].mxu0
        %v385 = vpop.f32.mrb[0].mxu0
        %v386 = vadd.f32 %v297, %v385
        %v387 = vpop.f32.mrb[0].mxu0
        %388 = vdwg.mxu0
        %v389 = vtanh.pop %v375
        %v390 = vtanh.pop %v378
        %v391 = vtanh.pop %v383
        %v392 = vtanh.pop %v386
        %v393 = vld [vmem:[%s3] sm:$0xff]
        %v394 = vld [vmem:[%s3 + $0x8] sm:$0xff]
        %v395 = vld [vmem:[%s3 + $0x10] sm:$0xff]
        %v396 = vld [vmem:[%s3 + $0x18] sm:$0xff]
        %398 = vset.pattern.permute.xlu0 0
        %399 = vperm.xlu0 %398, %v393
        %v400 = vpop.permute.xlu0 %399
        %403 = vset.pattern.permute.xlu0 0
        %404 = vperm.xlu0 %403, %v394
        %v405 = vpop.permute.xlu0 %404
        %408 = vset.pattern.permute.xlu0 0
        %409 = vperm.xlu0 %408, %v395
        %v410 = vpop.permute.xlu0 %409
        %413 = vset.pattern.permute.xlu0 0
        %414 = vperm.xlu0 %413, %v396
        %v415 = vpop.permute.xlu0 %414
        %v417 = vmul.f32 %v389, %v400
        %v418 = vmul.f32 %v390, %v405
        %v419 = vmul.f32 %v391, %v410
        %v420 = vmul.f32 %v392, %v415
        %v421 = vadd.f32 %v417, %v418
        %v422 = vadd.f32 %v421, %v419
        %v423 = vadd.f32 %v422, %v420
        %v424 = vrot.slane %v423, 4
        %v425 = vadd.f32 %v423, %v424
        %v426 = vrot.slane %v425, 2
        %v427 = vadd.f32 %v425, %v426
        %v428 = vrot.slane %v427, 1
        %v429 = vadd.f32 %v427, %v428
        %v430 = vld [vmem:[#allocation2] sm:$0x1]
        %432 = vset.pattern.permute.xlu0 0
        %433 = vperm.xlu0 %432, %v430
        %v434 = vpop.permute.xlu0 %433
        %v436 = vlaneseq
        %v437 = vshrl.u32 %v436, 7
        %v438 = vsub.s32 0, %v437
        %v439 = vrot.slane %v434, %v438
        %v440 = vadd.f32 %v429, %v439
        %441 = vst [vmem:[%s231] sm:$0x1] %v440
        %s442 = sand.u32 %s139, 1
        %s443 = scalar_lea.sflag [#allocation4], %s442
        %s444 = sand.u32 %s139, 1
        %s445 = scalar_lea.vmem [#allocation3], %s444
        // Predicated region
        $region41: #{tpu_custom_call.1} parent=39 // pred_check
          %p446 = pneg %p149
        $region42: #{tpu_custom_call.1} parent=39 // pred_check_branch
          %448 = sbr.rel (%p446) target = $region44
        $region43: #{tpu_custom_call.1} parent=39 // pred_region
          %s450 = ssub.s32 16, 16
          %451 = vsyncadd %s443, %s450
          %s452 = smul.addr %s21, 16
          %s453 = scalar_lea.hbm %s5, %s452
          %s455 = sshll.u32 %s445, 4
          %s456 = int_to_ptr.vmem [resolvable:$true] %s455
          %458 = dma.vmem_to_hbm [thread:$0]  %s456, 16, %s453, %s443
        $region44: #{tpu_custom_call.1} parent=39 // pred_fallthru
          _
      $region40: #{tpu_custom_call.1} parent=5 // pred_fallthru
        _
      %p459 = scmp.le.s32.totalorder 2, %s16
      // Predicated region
      $region45: #{tpu_custom_call.1} parent=5 // pred_check
        %p460 = pneg %p459
      $region46: #{tpu_custom_call.1} parent=5 // pred_check_branch
        %462 = sbr.rel (%p460) target = $region48
      $region47: #{tpu_custom_call.1} parent=5 // pred_region
        %s463 = ssub.s32 %s16, 2
        // Predicated region
        $region49: #{tpu_custom_call.1} parent=47 // pred_check
          %p464 = pneg %p155
        $region50: #{tpu_custom_call.1} parent=47 // pred_check_branch
          %466 = sbr.rel (%p464) target = $region52
        $region51: #{tpu_custom_call.1} parent=47 // pred_region
          %s467 = sand.u32 %s140, 1
          %s468 = scalar_lea.sflag [#allocation4], %s467
          %s469 = sand.u32 %s140, 1
          %s470 = scalar_lea.vmem [#allocation3], %s469
          %471 = dma.done %s468, 16
        $region52: #{tpu_custom_call.1} parent=47 // pred_fallthru
          _
      $region48: #{tpu_custom_call.1} parent=5 // pred_fallthru
        _
    $region6: #{tpu_custom_call.1} parent=1 // loop_footer
      %s20 = sadd.s32 1, %s16
    $region7: #{tpu_custom_call.1} parent=1 // loop_footer_branch
      %15 = sbr.rel target = $region3
    $region8: #{tpu_custom_call.1} parent=1 // loop_exit
      _
    %472 = vsyncpa [#allocation4], 1
    %s473 = scalar_lea.sflag [#allocation4], 1
    %474 = vsyncpa %s473, 1

</llo_original>
